<compile_context>
chip_gen: v7x
topology: tpu7x:2x2x1
jax: 0.10.0
libtpu: 0.0.40
codegen_flags: <defaults>
</compile_context>

<pallas_src>
import functools

import jax
import jax.numpy as jnp
from jax import lax
from jax.experimental import pallas as pl
from jax.experimental.pallas import tpu as pltpu


_CHUNK_ELEMS = 128 * 1024        # 512 KiB of f32 intermediates per sub-chunk
_MAX_BLOCK_ELEMS = 2048 * 512    # 4 MiB (f32) / 2 MiB (bf16) per input block


def _round_up(x, m):
    return (x + m - 1) // m * m


def _cdiv(a, b):
    return -(-a // b)


def _row_granularity(dtype):
    # Sublane packing: f32 -> 8 rows per vreg, bf16 -> 16, int8/fp8 -> 32.
    return max(8, 32 // jnp.dtype(dtype).itemsize)


def _choose_lanes(total):
    """Largest lane-dense last dim that divides the element count (no copy)."""
    for lanes in (512, 256, 128):
        if total % lanes == 0:
            return lanes, 0
    # Fallback: minimal pad to a multiple of 512 (costs one copy pass).
    return 512, _round_up(total, 512) - total


def _num_splits():
    """2-way 'parallel' row split only on multi-TensorCore chips."""
    try:
        kind = jax.devices()[0].device_kind.lower()
    except Exception:
        return 1
    if any(tag in kind for tag in ("v7", "tpu7", "v4", "v5p")):
        return 2
    return 1


def _pow_fast(d, gamma):
    """|d| ** gamma with multiply/sqrt fast paths (avoids exp(g*log|d|))."""
    g = float(gamma)
    if g == 2.0:
        return d * d
    if g == 1.0:
        return jnp.abs(d)
    if g == 3.0:
        return jnp.abs(d) * (d * d)
    if g == 4.0:
        dd = d * d
        return dd * dd
    if g == 0.5:
        return jnp.sqrt(jnp.abs(d))
    if g == 1.5:
        ad = jnp.abs(d)
        return ad * jnp.sqrt(ad)
    # Generic gamma (must be > 0): lowers to exp(gamma*log|d|) on the EUP.
    return jnp.power(jnp.abs(d), g)


def _vfl_partial_kernel(pred_ref, tgt_ref, out_ref, *, alpha, gamma, iou_weighted,
                        lanes, block_rows, chunk_rows, n_chunks,
                        inner_blocks, valid_rows, mask_rows):
    """Per-block NEGATED varifocal loss partial sums into a resident (1,8,lanes) block."""
    c = pl.program_id(0)
    i = pl.program_id(1)

    @pl.when(i == 0)
    def _():
        out_ref[...] = jnp.zeros_like(out_ref)

    # First global row of this (logical, un-clamped) block.  Duplicate blocks
    # produced by the clamped index_map land entirely past `valid_rows` and
    # are zeroed by the row mask.
    row0 = (c * inner_blocks + i) * block_rows

    def chunk_partial(row_off, p, t):
        p = p.astype(jnp.float32)
        t = t.astype(jnp.float32)

        mod = alpha * _pow_fast(p - t, gamma)
        # focal_weight = t*[t>0] + alpha*|p-t|^g*[t<=0]  (single select)
        if iou_weighted:
            fw = jnp.where(t > 0.0, t, mod)
        else:
            fw = jnp.where(t > 0.0, 1.0, mod)

        # F.binary_cross_entropy clamps each log term at -100.  The overall
        # negation is folded into the final scalar sum in the wrapper.
        log_p = jnp.maximum(jnp.log(p), -100.0)
        log_1mp = jnp.maximum(jnp.log(1.0 - p), -100.0)
        nloss = (t * (log_p - log_1mp) + log_1mp) * fw

        if mask_rows:
            rid = row0 + row_off + lax.broadcasted_iota(jnp.int32, (chunk_rows, 1), 0)
            nloss = jnp.where(rid < valid_rows, nloss, 0.0)

        # Pure vreg-wise VALU partial reduction (no cross-sublane XLU work):
        # (chunk_rows, lanes) -> (chunk_rows//8, 8, lanes) -> sum leading axis.
        return nloss.reshape(chunk_rows // 8, 8, lanes).sum(axis=0)

    if n_chunks == 1:
        acc = chunk_partial(0, pred_ref[...], tgt_ref[...])
    else:
        def body(j, acc):
            r = pl.multiple_of(j * chunk_rows, chunk_rows)
            return acc + chunk_partial(r,
                                       pred_ref[pl.ds(r, chunk_rows), :],
                                       tgt_ref[pl.ds(r, chunk_rows), :])
        acc = lax.fori_loop(0, n_chunks, body,
                            jnp.zeros((8, lanes), jnp.float32), unroll=True)

    out_ref[0] += acc


def _vfl_neg_total_sum(pred, target, *, alpha, gamma, iou_weighted):
    """Negated sum of elementwise varifocal loss (streamed in native dtype)."""
    total = pred.size
    # Mirror `target.type_as(pred)`; a no-op when dtypes already match.
    if target.dtype != pred.dtype:
        target = target.astype(pred.dtype)
    dtype = pred.dtype

    lanes, pad = _choose_lanes(total)
    if pad:
        # Fallback copy pass; zero padding contributes exactly 0 loss.
        pred2d = jnp.pad(pred.reshape(-1), (0, pad)).reshape(-1, lanes)
        tgt2d = jnp.pad(target.reshape(-1), (0, pad)).reshape(-1, lanes)
    else:
        pred2d = pred.reshape(-1, lanes)      # contiguous reshape: no copy
        tgt2d = target.reshape(-1, lanes)
    rows = (total + pad) // lanes

    gran = _row_granularity(dtype)
    chunk_rows = max(gran, _round_up(_CHUNK_ELEMS // lanes, gran))
    if rows <= chunk_rows:
        block_rows = _round_up(rows, gran)
        chunk_rows = block_rows
        n_chunks = 1
    else:
        n_chunks = max(1, min(_MAX_BLOCK_ELEMS // (chunk_rows * lanes),
                              _cdiv(rows, chunk_rows)))
        block_rows = n_chunks * chunk_rows

    total_blocks = _cdiv(rows, block_rows)
    num_splits = min(_num_splits(), total_blocks)
    inner_blocks = _cdiv(total_blocks, num_splits)

    mask_rows = (rows % block_rows != 0) or (num_splits * inner_blocks != total_blocks)

    if num_splits * inner_blocks == total_blocks:
        def in_map(c, i):
            return (c * inner_blocks + i, 0)
    else:
        last_block = total_blocks - 1

        def in_map(c, i):
            # Clamp so the DMA never targets a block start past the array; the
            # duplicate block it re-reads is fully zeroed by the row mask.
            return (jnp.minimum(c * inner_blocks + i, last_block), 0)

    kernel = functools.partial(
        _vfl_partial_kernel,
        alpha=float(alpha), gamma=float(gamma), iou_weighted=bool(iou_weighted),
        lanes=lanes, block_rows=block_rows, chunk_rows=chunk_rows,
        n_chunks=n_chunks, inner_blocks=inner_blocks,
        valid_rows=rows, mask_rows=mask_rows)

    in_block_bytes = block_rows * lanes * jnp.dtype(dtype).itemsize
    # 2 inputs x 2 pipeline buffers + ~10 MiB for f32 chunk temps / headroom.
    vmem_limit = int(4 * in_block_bytes + (10 << 20))

    partials = pl.pallas_call(
        kernel,
        out_shape=jax.ShapeDtypeStruct((num_splits, 8, lanes), jnp.float32),
        grid_spec=pltpu.PrefetchScalarGridSpec(
            num_scalar_prefetch=0,
            grid=(num_splits, inner_blocks),
            in_specs=[
                pl.BlockSpec((block_rows, lanes), in_map),
                pl.BlockSpec((block_rows, lanes), in_map),
            ],
            out_specs=pl.BlockSpec((1, 8, lanes), lambda c, i: (c, 0, 0)),
        ),
        compiler_params=pltpu.CompilerParams(
            dimension_semantics=("parallel", "arbitrary"),
            vmem_limit_bytes=vmem_limit),
    )(pred2d, tgt2d)

    # Tiny final reduce over (num_splits, 8, lanes) partials in plain JAX.
    return jnp.sum(partials)


def varifocal_loss_pallas(pred, target, *, alpha=0.75, gamma=2.0,
                          iou_weighted=True, reduction='mean',
                          avg_factor=None, loss_weight=1.0):
    """Varifocal loss. Supports reduction in {'mean', 'sum'} with weight=None.

    pred/target: float arrays (typically (N, C)); pred must be probabilities in (0, 1).
    """
    # TODO(synk): per-element `weight` and reduction='none' would need an
    # elementwise output path; only the default (weight=None, mean/sum) path
    # is implemented in-kernel.
    assert pred.shape == target.shape
    total_elems = pred.size

    # Kernel computes the NEGATED loss sum (one fewer VALU op per element).
    total = -_vfl_neg_total_sum(pred, target, alpha=alpha, gamma=gamma,
                                iou_weighted=iou_weighted)

    if avg_factor is None:
        if reduction == 'mean':
            loss = total / total_elems
        elif reduction == 'sum':
            loss = total
        else:
            raise NotImplementedError("reduction='none' not supported in this kernel")
    else:
        if reduction == 'mean':
            loss = total / avg_factor
        elif reduction == 'none':
            raise NotImplementedError("reduction='none' not supported in this kernel")
        else:
            raise ValueError('avg_factor can not be used with reduction="sum"')

    return loss_weight * loss


class VarifocalLossPallas:
    """Mirror of the PyTorch VarifocalLoss module (forward only)."""

    def __init__(self, alpha=0.75, gamma=2.0, iou_weighted=True,
                 reduction='mean', loss_weight=1.0):
        assert alpha >= 0.0
        self.alpha = alpha
        self.gamma = gamma
        self.iou_weighted = iou_weighted
        self.reduction = reduction
        self.loss_weight = loss_weight

    def __call__(self, pred, target, weight=None, avg_factor=None,
                 reduction_override=None):
        assert reduction_override in (None, 'none', 'mean', 'sum')
        assert weight is None  # see TODO(synk) above
        reduction = reduction_override if reduction_override else self.reduction
        return varifocal_loss_pallas(
            pred, target,
            alpha=self.alpha, gamma=self.gamma, iou_weighted=self.iou_weighted,
            reduction=reduction, avg_factor=avg_factor,
            loss_weight=self.loss_weight)


def _reference_varifocal(pred, target, alpha=0.75, gamma=2.0,
                         iou_weighted=True, reduction='mean'):
    pred = pred.astype(jnp.float32)
    target = target.astype(jnp.float32)
    pos = (target > 0.0).astype(jnp.float32)
    neg = (target <= 0.0).astype(jnp.float32)
    if iou_weighted:
        fw = target * pos + alpha * jnp.abs(pred - target) ** gamma * neg
    else:
        fw = pos + alpha * jnp.abs(pred - target) ** gamma * neg
    bce = -(target * jnp.maximum(jnp.log(pred), -100.0)
            + (1.0 - target) * jnp.maximum(jnp.log(1.0 - pred), -100.0))
    loss = bce * fw
    return loss.mean() if reduction == 'mean' else loss.sum()


if __name__ == "__main__":
    key = jax.random.PRNGKey(0)
    k1, k2, k3 = jax.random.split(key, 3)

    N, C = 128, 128  # small (N, C) classification-score matrix
    # pred must be probabilities (F.binary_cross_entropy expects inputs in (0,1)).
    pred = jax.nn.sigmoid(jax.random.normal(k1, (N, C), dtype=jnp.float32))
    # target: iou-aware scores — sparse positives in (0,1], zeros elsewhere.
    iou = jax.random.uniform(k2, (N, C), dtype=jnp.float32)
    pos_mask = jax.random.uniform(k3, (N, C)) < 0.1
    target = jnp.where(pos_mask, iou, 0.0).astype(jnp.float32)

    loss_mod = VarifocalLossPallas(alpha=0.75, gamma=2.0, iou_weighted=True,
                                   reduction='mean', loss_weight=1.0)
    out = jax.block_until_ready(loss_mod(pred, target))
    ref = _reference_varifocal(pred, target)
    assert jnp.allclose(out, ref, rtol=1e-5, atol=1e-6), (out, ref)

    # reduction='sum' path.
    out_sum = jax.block_until_ready(loss_mod(pred, target, reduction_override='sum'))
    ref_sum = _reference_varifocal(pred, target, reduction='sum')
    assert jnp.allclose(out_sum, ref_sum, rtol=1e-5, atol=1e-4), (out_sum, ref_sum)

    # Odd shape (total not a multiple of 128) -> padded fallback + row mask path.
    p2 = jax.nn.sigmoid(jax.random.normal(k1, (37, 5), dtype=jnp.float32))
    t2 = jnp.where(jax.random.uniform(k2, (37, 5)) < 0.2,
                   jax.random.uniform(k3, (37, 5), dtype=jnp.float32), 0.0)
    o2 = jax.block_until_ready(varifocal_loss_pallas(p2, t2))
    r2 = _reference_varifocal(p2, t2)
    assert jnp.allclose(o2, r2, rtol=1e-5, atol=1e-6), (o2, r2)

    # bf16 streaming path (HBM traffic halved; compute still f32 in-kernel).
    pb = pred.astype(jnp.bfloat16)
    tb = target.astype(jnp.bfloat16)
    ob = jax.block_until_ready(varifocal_loss_pallas(pb, tb))
    rb = _reference_varifocal(pb, tb)
    assert jnp.allclose(ob, rb, rtol=1e-3, atol=1e-5), (ob, rb)

    print("KERNEL_OK")
</pallas_src>

<mosaic_0001>
module attributes {stable_mosaic.version = 11 : i64} {
  func.func @_vfl_partial_kernel(%arg0: i32, %arg1: i32, %arg2: memref<32x512xf32, #tpu.memory_space<vmem>>, %arg3: memref<32x512xf32, #tpu.memory_space<vmem>>, %arg4: memref<1x8x512xf32, #tpu.memory_space<vmem>>) attributes {dimension_semantics = [#tpu.dimension_semantics<parallel>, #tpu.dimension_semantics<arbitrary>], iteration_bounds = array<i64: 1, 1>, scalar_prefetch = 0 : i64, scratch_operands = 0 : i64, tpu.core_type = #tpu.core_type<tc>, window_params = [{transform_indices = @transform_0, window_bounds = array<i64: 32, 512>}, {transform_indices = @transform_1, window_bounds = array<i64: 32, 512>}, {transform_indices = @transform_2, window_bounds = array<i64: 1, 8, 512>}]} {
    %c0_i32 = arith.constant 0 : i32
    %0 = arith.cmpi eq, %arg1, %c0_i32 : i32
    %1 = arith.extui %0 : i1 to i32
    %c0_i32_0 = arith.constant 0 : i32
    %2 = arith.cmpi ne, %1, %c0_i32_0 : i32
    scf.if %2 {
      %cst_15 = arith.constant 0.000000e+00 : f32
      %32 = vector.broadcast %cst_15 : f32 to vector<1x8x512xf32>
      %c0_16 = arith.constant 0 : index
      %c0_17 = arith.constant 0 : index
      %c0_18 = arith.constant 0 : index
      %33 = vector.load %arg4[%c0_16, %c0_17, %c0_18] : memref<1x8x512xf32, #tpu.memory_space<vmem>>, vector<1x8x512xf32>
      tpu.vector_store %arg4[%c0_16, %c0_17, %c0_18], %32 {strides = array<i32>} : memref<1x8x512xf32, #tpu.memory_space<vmem>>, vector<1x8x512xf32>,
    } else {
    }
    %c0 = arith.constant 0 : index
    %c0_1 = arith.constant 0 : index
    %3 = vector.load %arg2[%c0, %c0_1] : memref<32x512xf32, #tpu.memory_space<vmem>>, vector<32x512xf32>
    %c0_2 = arith.constant 0 : index
    %c0_3 = arith.constant 0 : index
    %4 = vector.load %arg3[%c0_2, %c0_3] : memref<32x512xf32, #tpu.memory_space<vmem>>, vector<32x512xf32>
    %5 = arith.subf %3, %4 : vector<32x512xf32>
    %6 = arith.mulf %5, %5 : vector<32x512xf32>
    %cst = arith.constant 7.500000e-01 : f32
    %7 = vector.broadcast %cst : f32 to vector<32x512xf32>
    %8 = arith.mulf %7, %6 : vector<32x512xf32>
    %cst_4 = arith.constant 0.000000e+00 : f32
    %9 = vector.broadcast %cst_4 : f32 to vector<32x512xf32>
    %10 = arith.cmpf ogt, %4, %9 : vector<32x512xf32>
    %11 = arith.select %10, %4, %8 : vector<32x512xi1>, vector<32x512xf32>
    %12 = math.log %3 : vector<32x512xf32>
    %cst_5 = arith.constant -1.000000e+02 : f32
    %13 = vector.broadcast %cst_5 : f32 to vector<32x512xf32>
    %14 = arith.maximumf %12, %13 : vector<32x512xf32>
    %cst_6 = arith.constant 1.000000e+00 : f32
    %15 = vector.broadcast %cst_6 : f32 to vector<32x512xf32>
    %16 = arith.subf %15, %3 : vector<32x512xf32>
    %17 = math.log %16 : vector<32x512xf32>
    %cst_7 = arith.constant -1.000000e+02 : f32
    %18 = vector.broadcast %cst_7 : f32 to vector<32x512xf32>
    %19 = arith.maximumf %17, %18 : vector<32x512xf32>
    %20 = arith.subf %14, %19 : vector<32x512xf32>
    %21 = arith.mulf %4, %20 : vector<32x512xf32>
    %22 = arith.addf %21, %19 : vector<32x512xf32>
    %23 = arith.mulf %22, %11 : vector<32x512xf32>
    %24 = vector.shape_cast %23 : vector<32x512xf32> to vector<4x8x512xf32>
    %cst_8 = arith.constant dense<0.000000e+00> : vector<8x512xf32>
    %25 = vector.multi_reduction <add>, %24, %cst_8 [0] : vector<4x8x512xf32> to vector<8x512xf32>
    %c0_9 = arith.constant 0 : index
    %c0_10 = arith.constant 0 : index
    %c0_11 = arith.constant 0 : index
    %26 = vector.load %arg4[%c0_9, %c0_10, %c0_11] : memref<1x8x512xf32, #tpu.memory_space<vmem>>, vector<1x8x512xf32>
    %27 = vector.shape_cast %26 : vector<1x8x512xf32> to vector<8x512xf32>
    %28 = arith.addf %27, %25 : vector<8x512xf32>
    %c0_12 = arith.constant 0 : index
    %c0_13 = arith.constant 0 : index
    %c0_14 = arith.constant 0 : index
    %29 = vector.load %arg4[%c0_12, %c0_13, %c0_14] : memref<1x8x512xf32, #tpu.memory_space<vmem>>, vector<1x8x512xf32>
    %30 = vector.shape_cast %29 : vector<1x8x512xf32> to vector<8x512xf32>
    %31 = vector.shape_cast %28 : vector<8x512xf32> to vector<1x8x512xf32>
    tpu.vector_store %arg4[%c0_12, %c0_13, %c0_14], %31 {strides = array<i32>} : memref<1x8x512xf32, #tpu.memory_space<vmem>>, vector<1x8x512xf32>,
    return
  }
  func.func @transform_0(%arg0: i32, %arg1: i32) -> (i32, i32) {
    %c1_i32 = arith.constant 1 : i32
    %0 = arith.muli %arg0, %c1_i32 : i32
    %1 = arith.addi %0, %arg1 : i32
    %c0_i32 = arith.constant 0 : i32
    %c0_i32_0 = arith.constant 0 : i32
    return %1, %c0_i32 : i32, i32
  }
  func.func @transform_1(%arg0: i32, %arg1: i32) -> (i32, i32) {
    %c1_i32 = arith.constant 1 : i32
    %0 = arith.muli %arg0, %c1_i32 : i32
    %1 = arith.addi %0, %arg1 : i32
    %c0_i32 = arith.constant 0 : i32
    %c0_i32_0 = arith.constant 0 : i32
    return %1, %c0_i32 : i32, i32
  }
  func.func @transform_2(%arg0: i32, %arg1: i32) -> (i32, i32, i32) {
    %c0_i32 = arith.constant 0 : i32
    %c0_i32_0 = arith.constant 0 : i32
    %c0_i32_1 = arith.constant 0 : i32
    return %arg0, %c0_i32, %c0_i32_0 : i32, i32, i32
  }
}

</mosaic_0001>

<llo_original>
// kernel: tpu_custom_call.1
$region0: #{tpu_custom_call.1}
  #allocation0 [shape = 'u32[]', space=smem, size = 0x4, offset = 0x4, fixed_abs, tag = 'smem constant byte address 0x4 - core index']
  #allocation1 [shape = 'u32[144,128]{1,0:T(1,128)}', space=vmem, size = 0x12000, scoped, tag = 'internal scratch']
  %s0 = inlined_call_operand.hbm [shape: f32[32,512], index: 0, kind: input, shape index: {}]
  %s1 = inlined_call_operand.hbm [shape: f32[32,512], index: 1, kind: input, shape index: {}]
  %s2 = inlined_call_operand.hbm [shape: f32[1,8,512], index: 2, kind: output, shape index: {}]
  %s3 = sld [smem:[#allocation0]]
  $region30: #{tpu_custom_call.1} parent=0
    _
  %s5 = ssub.s32 1, %s3
  %s6 = scalar_select 0, %s5, %s3
  $region1: #{tpu_custom_call.1} parent=0
    #allocation2 [shape = 'u8[65536]{0}', space=vmem, size = 0x10000, scoped, tag = 'input window, operand 0, single buffered']
    #allocation3 [shape = 's32[1]{0}', space=sflag, size = 0x4, scoped, tag = 'scoped memory for tpu_custom_call.1']
    #allocation4 [shape = 's32[1]{0}', space=sflag, size = 0x4, scoped, tag = 'scoped memory for tpu_custom_call.1']
    #allocation5 [shape = 'u8[65536]{0}', space=vmem, size = 0x10000, scoped, tag = 'input window, operand 1, single buffered']
    #allocation6 [shape = 's32[1]{0}', space=sflag, size = 0x4, scoped, tag = 'scoped memory for tpu_custom_call.1']
    #allocation7 [shape = 'u8[16384]{0}', space=vmem, size = 0x4000, scoped, tag = 'output window, operand 0, single buffered']
    %7 = vsyncpa [#allocation3], 0
    %8 = vsyncpa [#allocation6], 0
    %9 = vsyncpa [#allocation4], 0
    // Predicated region
    $region2: #{tpu_custom_call.1} parent=1 // pred_check
      _
    $region3: #{tpu_custom_call.1} parent=1 // pred_check_branch
      %11 = sbr.rel (0) target = $region5
    $region4: #{tpu_custom_call.1} parent=1 // pred_region
      %s12 = sadd.s32 0, 0
      %s13 = smul.u32 4, %s12
      %s15 = ssub.s32 2048, 2048
      %16 = vsyncadd [#allocation3], %s15
      %s17 = smul.addr %s13, 4
      %s18 = smul.addr %s17, 128
      %s19 = scalar_lea.hbm %s0, %s18
      %s20 = sshll.u32 [#allocation2], 4
      %s21 = int_to_ptr.vmem [resolvable:$true] %s20
      %26 = dma.hbm_to_vmem [thread:$0]  %s19, 2048, %s21, [#allocation3], 512, 512, 32
    $region5: #{tpu_custom_call.1} parent=1 // pred_fallthru
      _
    // Predicated region
    $region6: #{tpu_custom_call.1} parent=1 // pred_check
      _
    $region7: #{tpu_custom_call.1} parent=1 // pred_check_branch
      %28 = sbr.rel (0) target = $region9
    $region8: #{tpu_custom_call.1} parent=1 // pred_region
      %s29 = sadd.s32 0, 0
      %s30 = smul.u32 4, %s29
      %s32 = ssub.s32 2048, 2048
      %33 = vsyncadd [#allocation6], %s32
      %s34 = smul.addr %s30, 4
      %s35 = smul.addr %s34, 128
      %s36 = scalar_lea.hbm %s1, %s35
      %s37 = sshll.u32 [#allocation5], 4
      %s38 = int_to_ptr.vmem [resolvable:$true] %s37
      %43 = dma.hbm_to_vmem [thread:$0]  %s36, 2048, %s38, [#allocation6], 512, 512, 32
    $region9: #{tpu_custom_call.1} parent=1 // pred_fallthru
      _
    // Predicated region
    $region10: #{tpu_custom_call.1} parent=1 // pred_check
      _
    $region11: #{tpu_custom_call.1} parent=1 // pred_check_branch
      %45 = sbr.rel (0) target = $region13
    $region12: #{tpu_custom_call.1} parent=1 // pred_region
      %46 = dma.done [#allocation3], 2048
    $region13: #{tpu_custom_call.1} parent=1 // pred_fallthru
      _
    // Predicated region
    $region14: #{tpu_custom_call.1} parent=1 // pred_check
      _
    $region15: #{tpu_custom_call.1} parent=1 // pred_check_branch
      %48 = sbr.rel (0) target = $region17
    $region16: #{tpu_custom_call.1} parent=1 // pred_region
      %49 = dma.done [#allocation6], 2048
    $region17: #{tpu_custom_call.1} parent=1 // pred_fallthru
      _
    %s50 = sadd.s32 0, 0
    %s51 = smul.u32 4, %s50
    %s52 = sadd.s32 0, 0
    %s53 = smul.u32 4, %s52
    %p54 = scmp.eq.s32.totalorder 0, 0
    // Predicated region
    $region18: #{tpu_custom_call.1} parent=1 // pred_check
      %p55 = pneg %p54
    $region19: #{tpu_custom_call.1} parent=1 // pred_check_branch
      %57 = sbr.rel (%p55) target = $region21
    $region20: #{tpu_custom_call.1} parent=1 // pred_region
      %58 = vst [vmem:[#allocation7] sm:$0xff] 0.0
      %59 = vst [vmem:[#allocation7 + $0x8] sm:$0xff] 0.0
      %60 = vst [vmem:[#allocation7 + $0x10] sm:$0xff] 0.0
      %61 = vst [vmem:[#allocation7 + $0x18] sm:$0xff] 0.0
    $region21: #{tpu_custom_call.1} parent=1 // pred_fallthru
      _
    %v62 = vld [vmem:[#allocation2] sm:$0xff]
    %v63 = vld [vmem:[#allocation2 + $0x8] sm:$0xff]
    %v64 = vld [vmem:[#allocation2 + $0x10] sm:$0xff]
    %v65 = vld [vmem:[#allocation2 + $0x18] sm:$0xff]
    %v66 = vld [vmem:[#allocation2 + $0x20] sm:$0xff]
    %v67 = vld [vmem:[#allocation2 + $0x28] sm:$0xff]
    %v68 = vld [vmem:[#allocation2 + $0x30] sm:$0xff]
    %v69 = vld [vmem:[#allocation2 + $0x38] sm:$0xff]
    %v70 = vld [vmem:[#allocation2 + $0x40] sm:$0xff]
    %v71 = vld [vmem:[#allocation2 + $0x48] sm:$0xff]
    %v72 = vld [vmem:[#allocation2 + $0x50] sm:$0xff]
    %v73 = vld [vmem:[#allocation2 + $0x58] sm:$0xff]
    %v74 = vld [vmem:[#allocation2 + $0x60] sm:$0xff]
    %v75 = vld [vmem:[#allocation2 + $0x68] sm:$0xff]
    %v76 = vld [vmem:[#allocation2 + $0x70] sm:$0xff]
    %v77 = vld [vmem:[#allocation2 + $0x78] sm:$0xff]
    %v78 = vld [vmem:[#allocation5] sm:$0xff]
    %v79 = vld [vmem:[#allocation5 + $0x8] sm:$0xff]
    %v80 = vld [vmem:[#allocation5 + $0x10] sm:$0xff]
    %v81 = vld [vmem:[#allocation5 + $0x18] sm:$0xff]
    %v82 = vld [vmem:[#allocation5 + $0x20] sm:$0xff]
    %v83 = vld [vmem:[#allocation5 + $0x28] sm:$0xff]
    %v84 = vld [vmem:[#allocation5 + $0x30] sm:$0xff]
    %v85 = vld [vmem:[#allocation5 + $0x38] sm:$0xff]
    %v86 = vld [vmem:[#allocation5 + $0x40] sm:$0xff]
    %v87 = vld [vmem:[#allocation5 + $0x48] sm:$0xff]
    %v88 = vld [vmem:[#allocation5 + $0x50] sm:$0xff]
    %v89 = vld [vmem:[#allocation5 + $0x58] sm:$0xff]
    %v90 = vld [vmem:[#allocation5 + $0x60] sm:$0xff]
    %v91 = vld [vmem:[#allocation5 + $0x68] sm:$0xff]
    %v92 = vld [vmem:[#allocation5 + $0x70] sm:$0xff]
    %v93 = vld [vmem:[#allocation5 + $0x78] sm:$0xff]
    %v94 = vsub.f32 %v62, %v78
    %v95 = vsub.f32 %v63, %v79
    %v96 = vsub.f32 %v64, %v80
    %v97 = vsub.f32 %v65, %v81
    %v98 = vsub.f32 %v66, %v82
    %v99 = vsub.f32 %v67, %v83
    %v100 = vsub.f32 %v68, %v84
    %v101 = vsub.f32 %v69, %v85
    %v102 = vsub.f32 %v70, %v86
    %v103 = vsub.f32 %v71, %v87
    %v104 = vsub.f32 %v72, %v88
    %v105 = vsub.f32 %v73, %v89
    %v106 = vsub.f32 %v74, %v90
    %v107 = vsub.f32 %v75, %v91
    %v108 = vsub.f32 %v76, %v92
    %v109 = vsub.f32 %v77, %v93
    %v110 = vmul.f32 %v94, %v94
    %v111 = vmul.f32 %v95, %v95
    %v112 = vmul.f32 %v96, %v96
    %v113 = vmul.f32 %v97, %v97
    %v114 = vmul.f32 %v98, %v98
    %v115 = vmul.f32 %v99, %v99
    %v116 = vmul.f32 %v100, %v100
    %v117 = vmul.f32 %v101, %v101
    %v118 = vmul.f32 %v102, %v102
    %v119 = vmul.f32 %v103, %v103
    %v120 = vmul.f32 %v104, %v104
    %v121 = vmul.f32 %v105, %v105
    %v122 = vmul.f32 %v106, %v106
    %v123 = vmul.f32 %v107, %v107
    %v124 = vmul.f32 %v108, %v108
    %v125 = vmul.f32 %v109, %v109
    %v126 = vmul.f32 %v110, 0.75
    %v127 = vmul.f32 %v111, 0.75
    %v128 = vmul.f32 %v112, 0.75
    %v129 = vmul.f32 %v113, 0.75
    %v130 = vmul.f32 %v114, 0.75
    %v131 = vmul.f32 %v115, 0.75
    %v132 = vmul.f32 %v116, 0.75
    %v133 = vmul.f32 %v117, 0.75
    %v134 = vmul.f32 %v118, 0.75
    %v135 = vmul.f32 %v119, 0.75
    %v136 = vmul.f32 %v120, 0.75
    %v137 = vmul.f32 %v121, 0.75
    %v138 = vmul.f32 %v122, 0.75
    %v139 = vmul.f32 %v123, 0.75
    %v140 = vmul.f32 %v124, 0.75
    %v141 = vmul.f32 %v125, 0.75
    %vm142 = vcmp.gt.f32.partialorder %v78, 0.0
    %vm143 = vcmp.gt.f32.partialorder %v79, 0.0
    %vm144 = vcmp.gt.f32.partialorder %v80, 0.0
    %vm145 = vcmp.gt.f32.partialorder %v81, 0.0
    %vm146 = vcmp.gt.f32.partialorder %v82, 0.0
    %vm147 = vcmp.gt.f32.partialorder %v83, 0.0
    %vm148 = vcmp.gt.f32.partialorder %v84, 0.0
    %vm149 = vcmp.gt.f32.partialorder %v85, 0.0
    %vm150 = vcmp.gt.f32.partialorder %v86, 0.0
    %vm151 = vcmp.gt.f32.partialorder %v87, 0.0
    %vm152 = vcmp.gt.f32.partialorder %v88, 0.0
    %vm153 = vcmp.gt.f32.partialorder %v89, 0.0
    %vm154 = vcmp.gt.f32.partialorder %v90, 0.0
    %vm155 = vcmp.gt.f32.partialorder %v91, 0.0
    %vm156 = vcmp.gt.f32.partialorder %v92, 0.0
    %vm157 = vcmp.gt.f32.partialorder %v93, 0.0
    %v158 = vsel %vm142, %v78, %v126
    %v159 = vsel %vm143, %v79, %v127
    %v160 = vsel %vm144, %v80, %v128
    %v161 = vsel %vm145, %v81, %v129
    %v162 = vsel %vm146, %v82, %v130
    %v163 = vsel %vm147, %v83, %v131
    %v164 = vsel %vm148, %v84, %v132
    %v165 = vsel %vm149, %v85, %v133
    %v166 = vsel %vm150, %v86, %v134
    %v167 = vsel %vm151, %v87, %v135
    %v168 = vsel %vm152, %v88, %v136
    %v169 = vsel %vm153, %v89, %v137
    %v170 = vsel %vm154, %v90, %v138
    %v171 = vsel %vm155, %v91, %v139
    %v172 = vsel %vm156, %v92, %v140
    %v173 = vsel %vm157, %v93, %v141
    %v174 = vlog2.pop %v62
    %v175 = vmul.f32 %v174, 0.6931472
    %v176 = vlog2.pop %v63
    %v177 = vmul.f32 %v176, 0.6931472
    %v178 = vlog2.pop %v64
    %v179 = vmul.f32 %v178, 0.6931472
    %v180 = vlog2.pop %v65
    %v181 = vmul.f32 %v180, 0.6931472
    %v182 = vlog2.pop %v66
    %v183 = vmul.f32 %v182, 0.6931472
    %v184 = vlog2.pop %v67
    %v185 = vmul.f32 %v184, 0.6931472
    %v186 = vlog2.pop %v68
    %v187 = vmul.f32 %v186, 0.6931472
    %v188 = vlog2.pop %v69
    %v189 = vmul.f32 %v188, 0.6931472
    %v190 = vlog2.pop %v70
    %v191 = vmul.f32 %v190, 0.6931472
    %v192 = vlog2.pop %v71
    %v193 = vmul.f32 %v192, 0.6931472
    %v194 = vlog2.pop %v72
    %v195 = vmul.f32 %v194, 0.6931472
    %v196 = vlog2.pop %v73
    %v197 = vmul.f32 %v196, 0.6931472
    %v198 = vlog2.pop %v74
    %v199 = vmul.f32 %v198, 0.6931472
    %v200 = vlog2.pop %v75
    %v201 = vmul.f32 %v200, 0.6931472
    %v202 = vlog2.pop %v76
    %v203 = vmul.f32 %v202, 0.6931472
    %v204 = vlog2.pop %v77
    %v205 = vmul.f32 %v204, 0.6931472
    %v206 = vmax.f32 %v175, -100.0
    %v207 = vmax.f32 %v177, -100.0
    %v208 = vmax.f32 %v179, -100.0
    %v209 = vmax.f32 %v181, -100.0
    %v210 = vmax.f32 %v183, -100.0
    %v211 = vmax.f32 %v185, -100.0
    %v212 = vmax.f32 %v187, -100.0
    %v213 = vmax.f32 %v189, -100.0
    %v214 = vmax.f32 %v191, -100.0
    %v215 = vmax.f32 %v193, -100.0
    %v216 = vmax.f32 %v195, -100.0
    %v217 = vmax.f32 %v197, -100.0
    %v218 = vmax.f32 %v199, -100.0
    %v219 = vmax.f32 %v201, -100.0
    %v220 = vmax.f32 %v203, -100.0
    %v221 = vmax.f32 %v205, -100.0
    %v222 = vsub.f32 1.0, %v62
    %v223 = vsub.f32 1.0, %v63
    %v224 = vsub.f32 1.0, %v64
    %v225 = vsub.f32 1.0, %v65
    %v226 = vsub.f32 1.0, %v66
    %v227 = vsub.f32 1.0, %v67
    %v228 = vsub.f32 1.0, %v68
    %v229 = vsub.f32 1.0, %v69
    %v230 = vsub.f32 1.0, %v70
    %v231 = vsub.f32 1.0, %v71
    %v232 = vsub.f32 1.0, %v72
    %v233 = vsub.f32 1.0, %v73
    %v234 = vsub.f32 1.0, %v74
    %v235 = vsub.f32 1.0, %v75
    %v236 = vsub.f32 1.0, %v76
    %v237 = vsub.f32 1.0, %v77
    %v238 = vlog2.pop %v222
    %v239 = vmul.f32 %v238, 0.6931472
    %v240 = vlog2.pop %v223
    %v241 = vmul.f32 %v240, 0.6931472
    %v242 = vlog2.pop %v224
    %v243 = vmul.f32 %v242, 0.6931472
    %v244 = vlog2.pop %v225
    %v245 = vmul.f32 %v244, 0.6931472
    %v246 = vlog2.pop %v226
    %v247 = vmul.f32 %v246, 0.6931472
    %v248 = vlog2.pop %v227
    %v249 = vmul.f32 %v248, 0.6931472
    %v250 = vlog2.pop %v228
    %v251 = vmul.f32 %v250, 0.6931472
    %v252 = vlog2.pop %v229
    %v253 = vmul.f32 %v252, 0.6931472
    %v254 = vlog2.pop %v230
    %v255 = vmul.f32 %v254, 0.6931472
    %v256 = vlog2.pop %v231
    %v257 = vmul.f32 %v256, 0.6931472
    %v258 = vlog2.pop %v232
    %v259 = vmul.f32 %v258, 0.6931472
    %v260 = vlog2.pop %v233
    %v261 = vmul.f32 %v260, 0.6931472
    %v262 = vlog2.pop %v234
    %v263 = vmul.f32 %v262, 0.6931472
    %v264 = vlog2.pop %v235
    %v265 = vmul.f32 %v264, 0.6931472
    %v266 = vlog2.pop %v236
    %v267 = vmul.f32 %v266, 0.6931472
    %v268 = vlog2.pop %v237
    %v269 = vmul.f32 %v268, 0.6931472
    %v270 = vmax.f32 %v239, -100.0
    %v271 = vmax.f32 %v241, -100.0
    %v272 = vmax.f32 %v243, -100.0
    %v273 = vmax.f32 %v245, -100.0
    %v274 = vmax.f32 %v247, -100.0
    %v275 = vmax.f32 %v249, -100.0
    %v276 = vmax.f32 %v251, -100.0
    %v277 = vmax.f32 %v253, -100.0
    %v278 = vmax.f32 %v255, -100.0
    %v279 = vmax.f32 %v257, -100.0
    %v280 = vmax.f32 %v259, -100.0
    %v281 = vmax.f32 %v261, -100.0
    %v282 = vmax.f32 %v263, -100.0
    %v283 = vmax.f32 %v265, -100.0
    %v284 = vmax.f32 %v267, -100.0
    %v285 = vmax.f32 %v269, -100.0
    %v286 = vsub.f32 %v206, %v270
    %v287 = vsub.f32 %v207, %v271
    %v288 = vsub.f32 %v208, %v272
    %v289 = vsub.f32 %v209, %v273
    %v290 = vsub.f32 %v210, %v274
    %v291 = vsub.f32 %v211, %v275
    %v292 = vsub.f32 %v212, %v276
    %v293 = vsub.f32 %v213, %v277
    %v294 = vsub.f32 %v214, %v278
    %v295 = vsub.f32 %v215, %v279
    %v296 = vsub.f32 %v216, %v280
    %v297 = vsub.f32 %v217, %v281
    %v298 = vsub.f32 %v218, %v282
    %v299 = vsub.f32 %v219, %v283
    %v300 = vsub.f32 %v220, %v284
    %v301 = vsub.f32 %v221, %v285
    %v302 = vmul.f32 %v78, %v286
    %v303 = vmul.f32 %v79, %v287
    %v304 = vmul.f32 %v80, %v288
    %v305 = vmul.f32 %v81, %v289
    %v306 = vmul.f32 %v82, %v290
    %v307 = vmul.f32 %v83, %v291
    %v308 = vmul.f32 %v84, %v292
    %v309 = vmul.f32 %v85, %v293
    %v310 = vmul.f32 %v86, %v294
    %v311 = vmul.f32 %v87, %v295
    %v312 = vmul.f32 %v88, %v296
    %v313 = vmul.f32 %v89, %v297
    %v314 = vmul.f32 %v90, %v298
    %v315 = vmul.f32 %v91, %v299
    %v316 = vmul.f32 %v92, %v300
    %v317 = vmul.f32 %v93, %v301
    %v318 = vadd.f32 %v302, %v270
    %v319 = vadd.f32 %v303, %v271
    %v320 = vadd.f32 %v304, %v272
    %v321 = vadd.f32 %v305, %v273
    %v322 = vadd.f32 %v306, %v274
    %v323 = vadd.f32 %v307, %v275
    %v324 = vadd.f32 %v308, %v276
    %v325 = vadd.f32 %v309, %v277
    %v326 = vadd.f32 %v310, %v278
    %v327 = vadd.f32 %v311, %v279
    %v328 = vadd.f32 %v312, %v280
    %v329 = vadd.f32 %v313, %v281
    %v330 = vadd.f32 %v314, %v282
    %v331 = vadd.f32 %v315, %v283
    %v332 = vadd.f32 %v316, %v284
    %v333 = vadd.f32 %v317, %v285
    %v334 = vmul.f32 %v318, %v158
    %v335 = vmul.f32 %v319, %v159
    %v336 = vmul.f32 %v320, %v160
    %v337 = vmul.f32 %v321, %v161
    %v338 = vmul.f32 %v322, %v162
    %v339 = vmul.f32 %v323, %v163
    %v340 = vmul.f32 %v324, %v164
    %v341 = vmul.f32 %v325, %v165
    %v342 = vmul.f32 %v326, %v166
    %v343 = vmul.f32 %v327, %v167
    %v344 = vmul.f32 %v328, %v168
    %v345 = vmul.f32 %v329, %v169
    %v346 = vmul.f32 %v330, %v170
    %v347 = vmul.f32 %v331, %v171
    %v348 = vmul.f32 %v332, %v172
    %v349 = vmul.f32 %v333, %v173
    %v350 = vadd.f32 %v334, %v338
    %v351 = vadd.f32 %v350, %v342
    %v352 = vadd.f32 %v351, %v346
    %v353 = vadd.f32 %v335, %v339
    %v354 = vadd.f32 %v353, %v343
    %v355 = vadd.f32 %v354, %v347
    %v356 = vadd.f32 %v336, %v340
    %v357 = vadd.f32 %v356, %v344
    %v358 = vadd.f32 %v357, %v348
    %v359 = vadd.f32 %v337, %v341
    %v360 = vadd.f32 %v359, %v345
    %v361 = vadd.f32 %v360, %v349
    %v362 = vld [vmem:[#allocation7] sm:$0xff]
    %v363 = vld [vmem:[#allocation7 + $0x8] sm:$0xff]
    %v364 = vld [vmem:[#allocation7 + $0x10] sm:$0xff]
    %v365 = vld [vmem:[#allocation7 + $0x18] sm:$0xff]
    %v366 = vadd.f32 %v362, %v352
    %v367 = vadd.f32 %v363, %v355
    %v368 = vadd.f32 %v364, %v358
    %v369 = vadd.f32 %v365, %v361
    %370 = vst [vmem:[#allocation7] sm:$0xff] %v366
    %371 = vst [vmem:[#allocation7 + $0x8] sm:$0xff] %v367
    %372 = vst [vmem:[#allocation7 + $0x10] sm:$0xff] %v368
    %373 = vst [vmem:[#allocation7 + $0x18] sm:$0xff] %v369
    // Predicated region
    $region22: #{tpu_custom_call.1} parent=1 // pred_check
      _
    $region23: #{tpu_custom_call.1} parent=1 // pred_check_branch
      %375 = sbr.rel (0) target = $region25
    $region24: #{tpu_custom_call.1} parent=1 // pred_region
      %s377 = ssub.s32 512, 512
      %378 = vsyncadd [#allocation4], %s377
      %s380 = sshll.u32 [#allocation7], 4
      %s381 = int_to_ptr.vmem [resolvable:$true] %s380
      %383 = dma.vmem_to_hbm [thread:$0]  %s381, 512, %s2, [#allocation4]
    $region25: #{tpu_custom_call.1} parent=1 // pred_fallthru
      _
    // Predicated region
    $region26: #{tpu_custom_call.1} parent=1 // pred_check
      _
    $region27: #{tpu_custom_call.1} parent=1 // pred_check_branch
      %385 = sbr.rel (0) target = $region29
    $region28: #{tpu_custom_call.1} parent=1 // pred_region
      %386 = dma.done [#allocation4], 512
    $region29: #{tpu_custom_call.1} parent=1 // pred_fallthru
      _
    %387 = vsyncpa [#allocation3], 1
    %388 = vsyncpa [#allocation6], 1
    %389 = vsyncpa [#allocation4], 1

</llo_original>
